<compile_context>
chip_gen: v6e
topology: v6e:2x2x1
jax: 0.10.0
libtpu: 0.0.40
codegen_flags: <defaults>
</compile_context>

<pallas_src>
import functools

import jax
import jax.numpy as jnp
from jax import lax
from jax.experimental import pallas as pl
from jax.experimental.pallas import tpu as pltpu

HIDDEN = 100
HIDDEN_PAD = 128  # lane-dense hidden width


def _round_up(x, m):
    return (x + m - 1) // m * m


def net_kernel(x_ref, p_ref, o_ref, *, n_states, n_actions):
    # x: (B, n_states) f32
    # p: (rows, 128)   f32 packed parameter slab (see header)
    # o: (B, n_actions) f32
    b1_row = n_states
    w2_row = n_states + 1
    b2_row = n_states + 1 + n_actions

    x = x_ref[...]                                   # (B, n_states)
    w1t = p_ref[0:n_states, :]                       # (n_states, 128)  = w1.T, padded
    b1 = p_ref[b1_row:b1_row + 1, :]                 # (1, 128)         padded
    w2 = p_ref[w2_row:w2_row + n_actions, :]         # (n_actions, 128) w2 rows, padded
    b2 = p_ref[b2_row:b2_row + 1, 0:n_actions]       # (1, n_actions)

    # ---- Layer 1 (fc1) on the VPU: K = n_states broadcast FMAs. ----
    # (Perf review: MXU dot for K=4 was benchmark-neutral; keep the VPU path.)
    h = x[:, 0:1] * w1t[0:1, :] + b1                 # (B, 128)
    for k in range(1, n_states):                     # static unroll (tiny K)
        h = h + x[:, k:k + 1] * w1t[k:k + 1, :]
    h = jnp.maximum(h, 0.0)                          # F.relu, lane-dense; pad lanes stay 0

    # ---- Layer 2 (out) on the MXU: contract lane axes, no in-kernel transpose. ----
    # (B,128) x (n_actions,128) -> (B, n_actions), f32 accumulate.
    o = lax.dot_general(h, w2, (((1,), (1,)), ((), ())),
                        preferred_element_type=jnp.float32) + b2
    # TODO(synk): (B, n_actions) store is lane-sparse (masked vst); fuse argmax
    #             here if the consumer only needs the action index.
    o_ref[...] = o.astype(o_ref.dtype)


def prepare_params(w1, b1, w2, b2):
    """One-time parameter re-layout into a single (rows, 128) slab (NOT hot path).

    w1: (HIDDEN, N_STATES)  PyTorch (out, in) layout
    b1: (HIDDEN,)
    w2: (N_ACTIONS, HIDDEN)
    b2: (N_ACTIONS,)
    """
    hidden, n_states = w1.shape
    n_actions = w2.shape[0]
    assert hidden <= HIDDEN_PAD
    rows = _round_up(n_states + 1 + n_actions + 1, 8)   # 8 for CartPole sizes
    p = jnp.zeros((rows, HIDDEN_PAD), jnp.float32)
    p = p.at[0:n_states, :hidden].set(w1.T.astype(jnp.float32))
    p = p.at[n_states, :hidden].set(b1.astype(jnp.float32))
    p = p.at[n_states + 1:n_states + 1 + n_actions, :hidden].set(
        w2.astype(jnp.float32))
    p = p.at[n_states + 1 + n_actions, :n_actions].set(b2.astype(jnp.float32))
    return p


def net_forward(x, params, n_actions):
    """fc1 -> relu -> out as a single Pallas call (params already packed)."""
    B, n_states = x.shape

    itemsize = 4  # f32
    cost = pl.CostEstimate(
        flops=2 * B * n_states * HIDDEN_PAD + 2 * B * HIDDEN_PAD * n_actions,
        transcendentals=0,
        bytes_accessed=itemsize * (x.size + params.size + B * n_actions),
    )

    kernel = functools.partial(net_kernel, n_states=n_states, n_actions=n_actions)

    # DQN-sized problem: one full-array VMEM block per ref, no grid tiling.
    return pl.pallas_call(
        kernel,
        out_shape=jax.ShapeDtypeStruct((B, n_actions), jnp.float32),
        in_specs=[
            pl.BlockSpec(memory_space=pltpu.MemorySpace.VMEM),  # x
            pl.BlockSpec(memory_space=pltpu.MemorySpace.VMEM),  # packed param slab
        ],
        out_specs=pl.BlockSpec(memory_space=pltpu.MemorySpace.VMEM),
        cost_estimate=cost,
    )(x, params)


if __name__ == "__main__":
    # Environment-derived sizes (CartPole-style): N_STATES=4, N_ACTIONS=2.
    N_STATES = 4
    N_ACTIONS = 2
    BATCH = 8

    key = jax.random.PRNGKey(0)
    kx, kw1, kb1, kw2, kb2 = jax.random.split(key, 5)

    x = jax.random.normal(kx, (BATCH, N_STATES), dtype=jnp.float32)

    # Param init matching the module's __init__ semantics:
    #   weights ~ Normal(0, 0.1); biases use Linear default U(-1/sqrt(fan_in), 1/sqrt(fan_in)).
    w1 = 0.1 * jax.random.normal(kw1, (HIDDEN, N_STATES), dtype=jnp.float32)
    b1 = jax.random.uniform(kb1, (HIDDEN,), dtype=jnp.float32,
                            minval=-(N_STATES ** -0.5), maxval=N_STATES ** -0.5)
    w2 = 0.1 * jax.random.normal(kw2, (N_ACTIONS, HIDDEN), dtype=jnp.float32)
    b2 = jax.random.uniform(kb2, (N_ACTIONS,), dtype=jnp.float32,
                            minval=-(HIDDEN ** -0.5), maxval=HIDDEN ** -0.5)

    # One-time re-layout into a single packed slab (outside the hot path).
    params = prepare_params(w1, b1, w2, b2)

    actions_value = jax.block_until_ready(net_forward(x, params, N_ACTIONS))

    # Pure-JAX reference check (same math as the PyTorch forward, unpadded params).
    ref = jnp.maximum(x @ w1.T + b1, 0.0) @ w2.T + b2
    assert actions_value.shape == (BATCH, N_ACTIONS)
    assert bool(jnp.allclose(actions_value, ref, atol=1e-5, rtol=1e-5))

    print("KERNEL_OK")
</pallas_src>

<mosaic_0001>
module attributes {stable_mosaic.version = 11 : i64} {
  func.func @net_kernel(%arg0: memref<8x4xf32, #tpu.memory_space<vmem>>, %arg1: memref<8x128xf32, #tpu.memory_space<vmem>>, %arg2: memref<8x2xf32, #tpu.memory_space<vmem>>) attributes {dimension_semantics = [], scalar_prefetch = 0 : i64, scratch_operands = 0 : i64, tpu.core_type = #tpu.core_type<tc>} {
    %c0 = arith.constant 0 : index
    %c0_0 = arith.constant 0 : index
    %0 = vector.load %arg0[%c0, %c0_0] : memref<8x4xf32, #tpu.memory_space<vmem>>, vector<8x4xf32>
    %c0_1 = arith.constant 0 : index
    %c0_2 = arith.constant 0 : index
    %1 = vector.load %arg1[%c0_1, %c0_2] : memref<8x128xf32, #tpu.memory_space<vmem>>, vector<4x128xf32>
    %c4 = arith.constant 4 : index
    %c0_3 = arith.constant 0 : index
    %2 = vector.load %arg1[%c4, %c0_3] : memref<8x128xf32, #tpu.memory_space<vmem>>, vector<1x128xf32>
    %c5 = arith.constant 5 : index
    %c0_4 = arith.constant 0 : index
    %3 = vector.load %arg1[%c5, %c0_4] : memref<8x128xf32, #tpu.memory_space<vmem>>, vector<2x128xf32>
    %c7 = arith.constant 7 : index
    %c0_5 = arith.constant 0 : index
    %4 = vector.load %arg1[%c7, %c0_5] : memref<8x128xf32, #tpu.memory_space<vmem>>, vector<1x2xf32>
    %5 = vector.extract_strided_slice %0 {offsets = [0, 0], sizes = [8, 1], strides = [1, 1]} : vector<8x4xf32> to vector<8x1xf32>
    %6 = vector.extract_strided_slice %1 {offsets = [0, 0], sizes = [1, 128], strides = [1, 1]} : vector<4x128xf32> to vector<1x128xf32>
    %7 = vector.broadcast %5 : vector<8x1xf32> to vector<8x128xf32>
    %8 = vector.broadcast %6 : vector<1x128xf32> to vector<8x128xf32>
    %9 = arith.mulf %7, %8 : vector<8x128xf32>
    %10 = vector.broadcast %2 : vector<1x128xf32> to vector<8x128xf32>
    %11 = arith.addf %9, %10 : vector<8x128xf32>
    %12 = vector.extract_strided_slice %0 {offsets = [0, 1], sizes = [8, 1], strides = [1, 1]} : vector<8x4xf32> to vector<8x1xf32>
    %13 = vector.extract_strided_slice %1 {offsets = [1, 0], sizes = [1, 128], strides = [1, 1]} : vector<4x128xf32> to vector<1x128xf32>
    %14 = vector.broadcast %12 : vector<8x1xf32> to vector<8x128xf32>
    %15 = vector.broadcast %13 : vector<1x128xf32> to vector<8x128xf32>
    %16 = arith.mulf %14, %15 : vector<8x128xf32>
    %17 = arith.addf %11, %16 : vector<8x128xf32>
    %18 = vector.extract_strided_slice %0 {offsets = [0, 2], sizes = [8, 1], strides = [1, 1]} : vector<8x4xf32> to vector<8x1xf32>
    %19 = vector.extract_strided_slice %1 {offsets = [2, 0], sizes = [1, 128], strides = [1, 1]} : vector<4x128xf32> to vector<1x128xf32>
    %20 = vector.broadcast %18 : vector<8x1xf32> to vector<8x128xf32>
    %21 = vector.broadcast %19 : vector<1x128xf32> to vector<8x128xf32>
    %22 = arith.mulf %20, %21 : vector<8x128xf32>
    %23 = arith.addf %17, %22 : vector<8x128xf32>
    %24 = vector.extract_strided_slice %0 {offsets = [0, 3], sizes = [8, 1], strides = [1, 1]} : vector<8x4xf32> to vector<8x1xf32>
    %25 = vector.extract_strided_slice %1 {offsets = [3, 0], sizes = [1, 128], strides = [1, 1]} : vector<4x128xf32> to vector<1x128xf32>
    %26 = vector.broadcast %24 : vector<8x1xf32> to vector<8x128xf32>
    %27 = vector.broadcast %25 : vector<1x128xf32> to vector<8x128xf32>
    %28 = arith.mulf %26, %27 : vector<8x128xf32>
    %29 = arith.addf %23, %28 : vector<8x128xf32>
    %cst = arith.constant 0.000000e+00 : f32
    %30 = vector.broadcast %cst : f32 to vector<8x128xf32>
    %31 = arith.maximumf %29, %30 : vector<8x128xf32>
    %cst_6 = arith.constant dense<0.000000e+00> : vector<8x2xf32>
    %32 = tpu.matmul %31, %3, %cst_6 {dimension_numbers = #tpu.dot_dimension_numbers<[1], [1], [0], [0], [0, 0, 1, 0], [], []>} : vector<8x128xf32>, vector<2x128xf32>, vector<8x2xf32> -> vector<8x2xf32>
    %33 = vector.broadcast %4 : vector<1x2xf32> to vector<8x2xf32>
    %34 = arith.addf %32, %33 : vector<8x2xf32>
    %c0_7 = arith.constant 0 : index
    %c0_8 = arith.constant 0 : index
    %35 = vector.load %arg2[%c0_7, %c0_8] : memref<8x2xf32, #tpu.memory_space<vmem>>, vector<8x2xf32>
    tpu.vector_store %arg2[%c0_7, %c0_8], %34 {strides = array<i32>} : memref<8x2xf32, #tpu.memory_space<vmem>>, vector<8x2xf32>,
    return
  }
}

</mosaic_0001>

<llo_original>
// kernel: tpu_custom_call.1
$region0: #{tpu_custom_call.1}
  #allocation0 [shape = 'u32[]', space=smem, size = 0x4, offset = 0x4, fixed_abs, tag = 'smem constant byte address 0x4 - core index']
  #allocation1 [shape = 'u32[144,128]{1,0:T(1,128)}', space=vmem, size = 0x12000, scoped, tag = 'internal scratch']
  %s0 = inlined_call_operand.vmem [shape: f32[8,4], index: 0, kind: input, shape index: {}]
  %s1 = inlined_call_operand.vmem [shape: f32[8,128], index: 1, kind: input, shape index: {}]
  %s2 = inlined_call_operand.vmem [shape: f32[8,2], index: 2, kind: output, shape index: {}]
  %s3 = sld [smem:[#allocation0]]
  $region18: #{tpu_custom_call.1} parent=0
    _
  %s5 = ssub.s32 1, %s3
  %s6 = scalar_select 0, %s5, %s3
  // Predicated region
  $region2: #{tpu_custom_call.1} parent=0 // pred_check
    _
  $region3: #{tpu_custom_call.1} parent=0 // pred_check_branch
    %8 = sbr.rel (0) target = $region5
  $region4: #{tpu_custom_call.1} parent=0 // pred_region
    _
  $region5: #{tpu_custom_call.1} parent=0 // pred_fallthru
    _
  // Predicated region
  $region6: #{tpu_custom_call.1} parent=0 // pred_check
    _
  $region7: #{tpu_custom_call.1} parent=0 // pred_check_branch
    %10 = sbr.rel (0) target = $region9
  $region8: #{tpu_custom_call.1} parent=0 // pred_region
    _
  $region9: #{tpu_custom_call.1} parent=0 // pred_fallthru
    _
  %v11 = vld [vmem:[%s0] sm:$0xff]
  %v12 = vld [vmem:[%s1] sm:$0xf]
  %v13 = vld [vmem:[%s1 + $0x4] sm:$0x1]
  %v14 = vld [vmem:[%s1 + $0x5] sm:$0x3]
  %v15 = vld [vmem:[%s1 + $0x7] sm:$0x1]
  %17 = vset.pattern.permute.xlu0 0
  %18 = vperm.xlu0 %17, %v11
  %v19 = vpop.permute.xlu0 %18
  %v21 = vlaneseq
  %v22 = vshrl.u32 %v21, 7
  %v23 = vsub.s32 0, %v22
  %v24 = vrot.slane %v12, %v23
  %v25 = vmul.f32 %v19, %v24
  %v26 = vlaneseq
  %v27 = vshrl.u32 %v26, 7
  %v28 = vsub.s32 0, %v27
  %v29 = vrot.slane %v13, %v28
  %v30 = vadd.f32 %v25, %v29
  %31 = vset.pattern.permute.xlu0 1
  %32 = vperm.xlu0 %31, %v11
  %v33 = vpop.permute.xlu0 %32
  %v35 = vlaneseq
  %v36 = vshrl.u32 %v35, 7
  %v37 = vsub.s32 1, %v36
  %v38 = vrot.slane %v12, %v37
  %v39 = vmul.f32 %v33, %v38
  %v40 = vadd.f32 %v30, %v39
  %41 = vset.pattern.permute.xlu0 2
  %42 = vperm.xlu0 %41, %v11
  %v43 = vpop.permute.xlu0 %42
  %v45 = vlaneseq
  %v46 = vshrl.u32 %v45, 7
  %v47 = vsub.s32 2, %v46
  %v48 = vrot.slane %v12, %v47
  %v49 = vmul.f32 %v43, %v48
  %v50 = vadd.f32 %v40, %v49
  %51 = vset.pattern.permute.xlu0 3
  %52 = vperm.xlu0 %51, %v11
  %v53 = vpop.permute.xlu0 %52
  %v55 = vlaneseq
  %v56 = vshrl.u32 %v55, 7
  %v57 = vsub.s32 3, %v56
  %v58 = vrot.slane %v12, %v57
  %v59 = vmul.f32 %v53, %v58
  %v60 = vadd.f32 %v50, %v59
  %v61 = vmax.f32 %v60, 0.0
  %v62 = vlaneseq
  %v63 = vshrl.u32 %v62, 7
  %v64 = vsub.s32 0, %v63
  %v65 = vrot.slane %v15, %v64
  %66 = vmatprep.subr.mxu0 0.0
  %67 = vmatpush1.xpose.msra.mxu0 0.0
  %68 = vmatprep.subr.mxu0 0.0
  %69 = vmatpush1.xpose.msra.mxu0 0.0
  %70 = vmatprep.subr.mxu0 0.0
  %71 = vmatpush1.xpose.msra.mxu0 0.0
  %72 = vmatprep.subr.mxu0 0.0
  %73 = vmatpush1.xpose.msra.mxu0 0.0
  %74 = vmatprep.subr.mxu0 0.0
  %75 = vmatpush1.xpose.msra.mxu0 0.0
  %76 = vmatprep.subr.mxu0 0.0
  %77 = vmatpush1.xpose.msra.mxu0 0.0
  %78 = vmatprep.subr.mxu0 0.0
  %79 = vmatpush1.xpose.msra.mxu0 0.0
  %80 = vmatprep.subr.mxu0 0.0
  %81 = vmatpush1.xpose.msra.mxu0 0.0
  %82 = vmatprep.subr.mxu0 0.0
  %83 = vmatpush1.xpose.msra.mxu0 0.0
  %84 = vmatprep.subr.mxu0 0.0
  %85 = vmatpush1.xpose.msra.mxu0 0.0
  %86 = vmatprep.subr.mxu0 0.0
  %87 = vmatpush1.xpose.msra.mxu0 0.0
  %88 = vmatprep.subr.mxu0 0.0
  %89 = vmatpush1.xpose.msra.mxu0 0.0
  %90 = vmatprep.subr.mxu0 0.0
  %91 = vmatpush1.xpose.msra.mxu0 0.0
  %92 = vmatprep.subr.mxu0 0.0
  %93 = vmatpush1.xpose.msra.mxu0 0.0
  %94 = vmatprep.subr.mxu0 0.0
  %95 = vmatpush1.xpose.msra.mxu0 0.0
  %96 = vmatprep.subr.mxu0 0.0
  %97 = vmatpush1.xpose.msra.mxu0 %v14
  %98 = vmatprep.subr.mxu0 0.0
  %99 = vmatpush2.xpose.msra.mxu0 0.0
  %100 = vmatprep.subr.mxu0 0.0
  %101 = vmatpush2.xpose.msra.mxu0 0.0
  %102 = vmatprep.subr.mxu0 0.0
  %103 = vmatpush2.xpose.msra.mxu0 0.0
  %104 = vmatprep.subr.mxu0 0.0
  %105 = vmatpush2.xpose.msra.mxu0 0.0
  %106 = vmatprep.subr.mxu0 0.0
  %107 = vmatpush2.xpose.msra.mxu0 0.0
  %108 = vmatprep.subr.mxu0 0.0
  %109 = vmatpush2.xpose.msra.mxu0 0.0
  %110 = vmatprep.subr.mxu0 0.0
  %111 = vmatpush2.xpose.msra.mxu0 0.0
  %112 = vmatprep.subr.mxu0 0.0
  %113 = vmatpush2.xpose.msra.mxu0 0.0
  %114 = vmatprep.subr.mxu0 0.0
  %115 = vmatpush2.xpose.msra.mxu0 0.0
  %116 = vmatprep.subr.mxu0 0.0
  %117 = vmatpush2.xpose.msra.mxu0 0.0
  %118 = vmatprep.subr.mxu0 0.0
  %119 = vmatpush2.xpose.msra.mxu0 0.0
  %120 = vmatprep.subr.mxu0 0.0
  %121 = vmatpush2.xpose.msra.mxu0 0.0
  %122 = vmatprep.subr.mxu0 0.0
  %123 = vmatpush2.xpose.msra.mxu0 0.0
  %124 = vmatprep.subr.mxu0 0.0
  %125 = vmatpush2.xpose.msra.mxu0 0.0
  %126 = vmatprep.subr.mxu0 0.0
  %127 = vmatpush2.xpose.msra.mxu0 0.0
  %128 = vmatprep.subr.mxu0 0.0
  %129 = vmatpush2.xpose.msra.mxu0 0.0
  %130 = vmatprep.mubr.f32.mxu0 0.0
  %131 = vmatmul.mubr.f32.gmra.mxu0 %v61
  %v132 = vpop.f32.mrf.mxu0
  %v133 = vadd.f32 %v65, %v132
  %v134 = vpop.f32.mrf.mxu0
  %135 = vdwg.mxu0
  %vm136 = vcmask 15360
  %137 = vst.msk [vmem:[%s2] sm:$0xff] %vm136, %v133
  // Predicated region
  $region10: #{tpu_custom_call.1} parent=0 // pred_check
    _
  $region11: #{tpu_custom_call.1} parent=0 // pred_check_branch
    %139 = sbr.rel (0) target = $region13
  $region12: #{tpu_custom_call.1} parent=0 // pred_region
    _
  $region13: #{tpu_custom_call.1} parent=0 // pred_fallthru
    _
  // Predicated region
  $region14: #{tpu_custom_call.1} parent=0 // pred_check
    _
  $region15: #{tpu_custom_call.1} parent=0 // pred_check_branch
    %141 = sbr.rel (0) target = $region17
  $region16: #{tpu_custom_call.1} parent=0 // pred_region
    _
  $region17: #{tpu_custom_call.1} parent=0 // pred_fallthru
    _

</llo_original>
